<compile_context>
chip_gen: v6e
topology: v6e:2x2x1
jax: 0.10.0
libtpu: 0.0.40
codegen_flags: <defaults>
</compile_context>

<pallas_src>
import math

import jax
import jax.numpy as jnp
from jax.experimental import pallas as pl
from jax.experimental.pallas import tpu as pltpu

LANE = 128
VMEM_LIMIT = 48 * 1024 * 1024  # below v7x 64 MiB physical, above default scoped limits


# ------------------------------ small helpers --------------------------------

def _round_up(n, m):
    return ((n + m - 1) // m) * m


def _pick_tile(*stored_lens):
    """Largest lane tile in {512, 256, 128} dividing every stored length."""
    for t in (512, 256, 128):
        if all(s % t == 0 for s in stored_lens):
            return t
    return LANE


def to_stored(x):
    """Pad the last dim with zeros to a multiple of LANE (lane-dense storage)."""
    L = x.shape[-1]
    Ls = max(_round_up(L, LANE), LANE)
    if Ls == L:
        return x
    pad = [(0, 0)] * (x.ndim - 1) + [(0, Ls - L)]
    return jnp.pad(x, pad)


# --------------------- GroupNorm stats (pass 1, Pallas) -----------------------

def _gn_stats_kernel(x_ref, o_ref):
    # grid = (B, nT); accumulate per-channel sum / sum-of-squares over L tiles.
    @pl.when(pl.program_id(1) == 0)
    def _():
        o_ref[...] = jnp.zeros_like(o_ref)

    x = x_ref[...]                                           # (C, T) f32
    s1 = jnp.sum(x, axis=1, keepdims=True)                   # zero tail -> exact
    s2 = jnp.sum(x * x, axis=1, keepdims=True)
    o_ref[...] += jnp.concatenate([s1, s2], axis=1)          # (C, 2)


def group_norm_affine(x, L_valid, gamma, beta, groups, eps=1e-5):
    """Two-pass GroupNorm: global stats -> per-channel (scale, shift), each (B, C)."""
    B, C, Ls = x.shape
    T = _pick_tile(Ls)
    nT = Ls // T
    sums = pl.pallas_call(
        _gn_stats_kernel,
        out_shape=jax.ShapeDtypeStruct((B, C, 2), jnp.float32),
        grid=(B, nT),
        in_specs=[pl.BlockSpec((None, C, T), lambda bb, tt: (bb, 0, tt))],
        out_specs=pl.BlockSpec((None, C, 2), lambda bb, tt: (bb, 0, 0)),
        compiler_params=pltpu.CompilerParams(
            dimension_semantics=("parallel", "arbitrary"),
            vmem_limit_bytes=VMEM_LIMIT),
    )(x)
    cg = C // groups
    cnt = float(cg * L_valid)
    s1 = sums[:, :, 0].reshape(B, groups, cg).sum(-1)        # (B, G)
    s2 = sums[:, :, 1].reshape(B, groups, cg).sum(-1)
    mu = s1 / cnt
    var = jnp.maximum(s2 / cnt - mu * mu, 0.0)               # guard f32 cancellation
    rstd = jax.lax.rsqrt(var + eps)
    mu_c = jnp.repeat(mu, cg, axis=1)                        # (B, C)
    rstd_c = jnp.repeat(rstd, cg, axis=1)
    scale = rstd_c * gamma[None, :]
    shift = beta[None, :] - mu_c * scale
    return scale, shift


# --------------------- fused [GN+SiLU] -> conv -> epilogue kernel -------------

def _make_conv_kernel(*, K, pad, T, L_in_valid, L_out_valid, L_out_stored,
                      do_gn, has_res, has_resproj, do_tanh):
    need_prev = pad > 0
    need_next = (K - 1 - pad) > 0
    need_in_mask = do_gn or K > 1
    need_out_mask = L_out_valid != L_out_stored

    def kernel(*refs):
        it = iter(refs)
        x_cur_ref = next(it)
        x_prev_ref = next(it) if need_prev else None
        x_next_ref = next(it) if need_next else None
        w_ref = next(it)
        b_ref = next(it)
        scale_ref = next(it) if do_gn else None
        shift_ref = next(it) if do_gn else None
        res_ref = next(it) if has_res else None
        rw_ref = next(it) if has_resproj else None
        rb_ref = next(it) if has_resproj else None
        o_ref = next(it)

        t = pl.program_id(1)
        base = t * T
        lane = jax.lax.broadcasted_iota(jnp.int32, (1, T), 1)   # hoisted, reused

        def prep(ref):
            v = ref[...]                                         # (Cin, T) f32
            if do_gn:
                v = v * scale_ref[...] + shift_ref[...]          # per-channel affine
                v = v * jax.nn.sigmoid(v)                        # SiLU (f32, VPU+EUP)
            return v

        cur = prep(x_cur_ref)
        prv = prep(x_prev_ref) if need_prev else None
        nxt = prep(x_next_ref) if need_next else None

        # Build the K tap operands with XLU rolls + selects (no unaligned slices),
        # stack them along channels -> one deep-contraction MXU matmul.
        taps = []
        for k in range(K):
            d = k - pad
            if d == 0:
                op = cur
            elif d > 0:
                sh = (-d) % T
                op = jnp.where(lane < T - d,
                               pltpu.roll(cur, sh, 1),
                               pltpu.roll(nxt, sh, 1))
            else:
                sh = (-d) % T
                op = jnp.where(lane >= -d,
                               pltpu.roll(cur, sh, 1),
                               pltpu.roll(prv, sh, 1))
            if need_in_mask:
                src = base + lane + d
                op = jnp.where((src >= 0) & (src < L_in_valid), op, 0.0)
            taps.append(op)
        xk = taps[0] if K == 1 else jnp.concatenate(taps, axis=0)   # (K*Cin, T)

        acc = jnp.dot(w_ref[...], xk.astype(jnp.bfloat16),
                      preferred_element_type=jnp.float32)           # (Cout, T) f32
        acc = acc + b_ref[...]

        if has_resproj:
            acc = acc + jnp.dot(rw_ref[...], res_ref[...].astype(jnp.bfloat16),
                                preferred_element_type=jnp.float32)
            acc = acc + rb_ref[...]
        elif has_res:
            acc = acc + res_ref[...]
        if do_tanh:
            acc = jnp.tanh(acc)
        if need_out_mask:
            acc = jnp.where(base + lane < L_out_valid, acc, 0.0)    # keep zero tail
        o_ref[...] = acc

    return kernel


def fused_conv(x, L_in, w, b, *, K, pad, gn=None, res=None, res_proj=None,
               tanh=False):
    """Fused [GN+SiLU] -> Conv1d(stride=1) -> [+res | +1x1conv(res)] -> [tanh].

    x:        (B, Cin, L_in_stored) f32, zero tail beyond L_in valid columns.
    w:        (Cout, K*Cin) bf16 tap-stacked weight;   b: (Cout,) f32.
    gn:       None | (scale (B, Cin), shift (B, Cin))  per-channel affine (global stats).
    res:      None | (B, Cres, L_in_stored) residual input.
    res_proj: None | (rw (Cout, Cres) bf16, rb (Cout,) f32) 1x1 residual projection.
    Returns (out (B, Cout, L_out_stored) f32 with zero tail, L_out_valid).
    """
    B, Cin, L_in_stored = x.shape
    Cout = w.shape[0]
    assert w.shape[1] == K * Cin
    L_out = L_in + 2 * pad - K + 1
    assert L_out > 0 and L_out <= L_in
    L_out_stored = max(_round_up(L_out, LANE), LANE)

    lens = [L_in_stored, L_out_stored]
    if res is not None:
        lens.append(res.shape[-1])
    T = _pick_tile(*lens)
    nTo = L_out_stored // T
    nTi = L_in_stored // T
    need_prev = pad > 0
    need_next = (K - 1 - pad) > 0

    in_specs = [pl.BlockSpec((None, Cin, T), lambda bb, tt: (bb, 0, tt))]
    inputs = [x]
    if need_prev:
        in_specs.append(pl.BlockSpec(
            (None, Cin, T), lambda bb, tt: (bb, 0, jnp.maximum(tt - 1, 0))))
        inputs.append(x)
    if need_next:
        last_in = nTi - 1
        in_specs.append(pl.BlockSpec(
            (None, Cin, T), lambda bb, tt: (bb, 0, jnp.minimum(tt + 1, last_in))))
        inputs.append(x)
    in_specs += [pl.BlockSpec((Cout, K * Cin), lambda bb, tt: (0, 0)),
                 pl.BlockSpec((Cout, 1), lambda bb, tt: (0, 0))]
    inputs += [w, b.reshape(Cout, 1).astype(jnp.float32)]
    if gn is not None:
        scale, shift = gn
        in_specs += [pl.BlockSpec((None, Cin, 1), lambda bb, tt: (bb, 0, 0)),
                     pl.BlockSpec((None, Cin, 1), lambda bb, tt: (bb, 0, 0))]
        inputs += [scale.reshape(B, Cin, 1), shift.reshape(B, Cin, 1)]
    if res is not None:
        Cres = res.shape[1]
        if res_proj is None:
            assert Cres == Cout
        in_specs.append(pl.BlockSpec((None, Cres, T), lambda bb, tt: (bb, 0, tt)))
        inputs.append(res)
        if res_proj is not None:
            rw, rb = res_proj
            in_specs += [pl.BlockSpec((Cout, Cres), lambda bb, tt: (0, 0)),
                         pl.BlockSpec((Cout, 1), lambda bb, tt: (0, 0))]
            inputs += [rw, rb.reshape(Cout, 1).astype(jnp.float32)]

    kernel = _make_conv_kernel(
        K=K, pad=pad, T=T, L_in_valid=L_in, L_out_valid=L_out,
        L_out_stored=L_out_stored, do_gn=gn is not None, has_res=res is not None,
        has_resproj=res_proj is not None, do_tanh=tanh)

    out = pl.pallas_call(
        kernel,
        out_shape=jax.ShapeDtypeStruct((B, Cout, L_out_stored), jnp.float32),
        grid=(B, nTo),
        in_specs=in_specs,
        out_specs=pl.BlockSpec((None, Cout, T), lambda bb, tt: (bb, 0, tt)),
        compiler_params=pltpu.CompilerParams(
            dimension_semantics=("parallel", "parallel"),
            vmem_limit_bytes=VMEM_LIMIT),
    )(*inputs)
    return out, L_out


# ------------------------------- model blocks --------------------------------

def resnet_block(x, Lv, p):
    # block1: GN+SiLU+Conv3;  block2: GN+SiLU+Conv3 with the residual fused in.
    s1, sh1 = group_norm_affine(x, Lv, p["g1"], p["bt1"], p["groups"])
    h, Lh = fused_conv(x, Lv, p["w1"], p["b1"], K=3, pad=1, gn=(s1, sh1))
    s2, sh2 = group_norm_affine(h, Lh, p["g2"], p["bt2"], p["groups"])
    rp = (p["rw"], p["rb"]) if "rw" in p else None
    return fused_conv(h, Lh, p["w2"], p["b2"], K=3, pad=1, gn=(s2, sh2),
                      res=x, res_proj=rp)


def patch_rearrange(x, Lv, p):
    # einops: "b c (l p) -> b (c p) l"
    B, C, _ = x.shape
    assert Lv % p == 0
    xv = x[:, :, :Lv]
    Lo = Lv // p
    y = xv.reshape(B, C, Lo, p).transpose(0, 1, 3, 2).reshape(B, C * p, Lo)
    return to_stored(y), Lo


def unpatch_rearrange(x, Lv, p):
    # einops: "b (c p) l -> b c (l p)"
    B, CP, _ = x.shape
    C = CP // p
    xv = x[:, :, :Lv]
    y = xv.reshape(B, C, p, Lv).transpose(0, 1, 3, 2).reshape(B, C, Lv * p)
    return to_stored(y), Lv * p


def downsample(x, Lv, d):
    """Downsample1d = Conv1d(K=2f+1, stride=f, padding=f), as a polyphase stride-1
    conv: phases stacked on channels, J=3 taps with phase-packed weights."""
    B, Cin, _ = x.shape
    s, K, J = d["factor"], d["K"], d["J"]
    L_out = (Lv - 1) // s + 1
    Lph = L_out + J - 1
    total = s * Lph
    xv = x[:, :, :Lv]
    xp = jnp.pad(xv, ((0, 0), (0, 0), (s, total - Lv - s)))
    xph = xp.reshape(B, Cin, Lph, s).transpose(0, 3, 1, 2).reshape(B, s * Cin, Lph)
    return fused_conv(to_stored(xph), Lph, d["w"], d["b"], K=J, pad=0)


def upsample(x, Lv, up):
    """Upsample1d = ConvTranspose1d(K=2f, stride=f), as f polyphase stride-1 convs
    in one fused kernel (K=3, pad=1; halos handled in-kernel) + an interleave."""
    s, co = up["stride"], up["c_out"]
    y, Lo = fused_conv(x, Lv, up["w"], up["b"], K=3, pad=1)   # (B, s*co, stored)
    B = x.shape[0]
    yv = y[:, :, :Lo]
    out = yv.reshape(B, s, co, Lo).transpose(0, 2, 3, 1).reshape(B, co, Lo * s)
    return to_stored(out), Lo * s


# ------------------------------ parameter init -------------------------------

def _uniform(key, shape, bound):
    return jax.random.uniform(key, shape, jnp.float32, -bound, bound)


def init_conv(key, c_out, c_in, k):
    kw, kb = jax.random.split(key)
    bound = 1.0 / math.sqrt(c_in * k)
    w = _uniform(kw, (c_out, c_in, k), bound)
    b = _uniform(kb, (c_out,), bound)
    w_packed = w.transpose(0, 2, 1).reshape(c_out, k * c_in).astype(jnp.bfloat16)
    return w_packed, b


def init_resnet_block(key, c_in, c_out, groups):
    k1, k2, k3 = jax.random.split(key, 3)
    w1, b1 = init_conv(k1, c_out, c_in, 3)
    w2, b2 = init_conv(k2, c_out, c_out, 3)
    p = dict(groups=groups,
             w1=w1, b1=b1, g1=jnp.ones((c_in,), jnp.float32),
             bt1=jnp.zeros((c_in,), jnp.float32),
             w2=w2, b2=b2, g2=jnp.ones((c_out,), jnp.float32),
             bt2=jnp.zeros((c_out,), jnp.float32))
    if c_in != c_out:
        rw, rb = init_conv(k3, c_out, c_in, 1)                # (Cout, Cin) bf16
        p["rw"], p["rb"] = rw, rb
    return p


def init_downsample(key, c_in, c_out, factor):
    K = 2 * factor + 1
    kw, kb = jax.random.split(key)
    bound = 1.0 / math.sqrt(c_in * K)
    w = _uniform(kw, (c_out, c_in, K), bound)
    b = _uniform(kb, (c_out,), bound)
    J = -(-K // factor)                                       # == 3
    # Phase-pack: W'[j, co, r*Cin + ci] = w[co, ci, j*f + r]  (zero past K)
    w_pad = jnp.pad(w, ((0, 0), (0, 0), (0, J * factor - K)))
    w_phase = (w_pad.reshape(c_out, c_in, J, factor)
               .transpose(2, 0, 3, 1).reshape(J, c_out, factor * c_in))
    w_packed = jnp.concatenate([w_phase[j] for j in range(J)],
                               axis=1).astype(jnp.bfloat16)   # (Cout, J*f*Cin)
    return dict(w=w_packed, b=b, factor=factor, K=K, J=J)


def init_upsample(key, c_in, c_out, factor):
    s = factor
    K = 2 * s
    p = s // 2 + s % 2                                        # ConvT padding in Upsample1d
    kw, kb = jax.random.split(key)
    bound = 1.0 / math.sqrt(c_out * K)
    w = _uniform(kw, (c_in, c_out, K), bound)
    b = _uniform(kb, (c_out,), bound)
    wt = jnp.transpose(w, (1, 0, 2))                          # (Cout, Cin, K)
    # Polyphase: y[co, q*s + r] = wt[:,:,k0] @ x[q+d0] + wt[:,:,k1] @ x[q+d0-1]
    # with k0=(r+p)%s, k1=k0+s, d0=(r+p)//s -> a 3-tap pad=1 stride-1 conv.
    W = jnp.zeros((3, s * c_out, c_in), jnp.float32)
    for r in range(s):
        k0 = (r + p) % s
        k1 = k0 + s
        d0 = (r + p) // s
        W = W.at[d0 + 1, r * c_out:(r + 1) * c_out, :].set(wt[:, :, k0])
        W = W.at[d0, r * c_out:(r + 1) * c_out, :].set(wt[:, :, k1])
    w_packed = jnp.concatenate([W[d] for d in range(3)],
                               axis=1).astype(jnp.bfloat16)   # (s*Cout, 3*Cin)
    return dict(kind="convT", w=w_packed, b=jnp.tile(b, s), stride=s, c_out=c_out)


def init_ae1d_params(key, *, in_channels, channels, multipliers, factors,
                     num_blocks, patch_size, resnet_groups, bottleneck_channels):
    out_channels = in_channels
    keys = iter(jax.random.split(key, 128))
    num_layers = len(multipliers) - 1

    # ---- Encoder1d ----
    enc = {}
    c0 = channels * multipliers[0]
    enc["patcher"] = init_resnet_block(next(keys), in_channels, c0 // patch_size, 1)
    enc["downs"] = []
    for i in range(num_layers):
        ci = channels * multipliers[i]
        co = channels * multipliers[i + 1]
        down = init_downsample(next(keys), ci, co, factors[i])
        blocks = [init_resnet_block(next(keys), co, co, resnet_groups)
                  for _ in range(num_blocks[i])]
        enc["downs"].append(dict(down=down, blocks=blocks))
    tw, tb = init_conv(next(keys), bottleneck_channels, channels * multipliers[-1], 1)
    enc["to_out_w"], enc["to_out_b"] = tw, tb

    # ---- Decoder1d (reversed multipliers / factors / num_blocks) ----
    m_r, f_r, nb_r = multipliers[::-1], factors[::-1], num_blocks[::-1]
    dec = {}
    iw, ib = init_conv(next(keys), channels * m_r[0], bottleneck_channels, 1)
    dec["to_in_w"], dec["to_in_b"] = iw, ib
    dec["ups"] = []
    for i in range(num_layers):
        ci = channels * m_r[i]
        co = channels * m_r[i + 1]
        blocks = [init_resnet_block(next(keys), ci, ci, resnet_groups)
                  for _ in range(nb_r[i])]
        if f_r[i] > 1:
            up = init_upsample(next(keys), ci, co, f_r[i])
        else:
            w3, b3 = init_conv(next(keys), co, ci, 3)
            up = dict(kind="conv", w=w3, b=b3)
        dec["ups"].append(dict(blocks=blocks, up=up))
    dec["unpatcher"] = init_resnet_block(
        next(keys), (channels * m_r[-1]) // patch_size, out_channels, 1)

    return dict(encoder=enc, decoder=dec, patch_size=patch_size)


# --------------------------------- forward -----------------------------------

def encode(x, Lv, enc, patch_size):
    x, Lv = resnet_block(x, Lv, enc["patcher"])
    x, Lv = patch_rearrange(x, Lv, patch_size)
    for d in enc["downs"]:
        x, Lv = downsample(x, Lv, d["down"])
        for blk in d["blocks"]:
            x, Lv = resnet_block(x, Lv, blk)
    # to_out 1x1 conv with the TanhBottleneck fused into its epilogue
    # TODO(synk): fold this tiny 1x1 into the preceding resnet kernel's epilogue.
    return fused_conv(x, Lv, enc["to_out_w"], enc["to_out_b"], K=1, pad=0, tanh=True)


def decode(z, Lz, dec, patch_size):
    x, Lv = fused_conv(z, Lz, dec["to_in_w"], dec["to_in_b"], K=1, pad=0)
    for u in dec["ups"]:
        for blk in u["blocks"]:
            x, Lv = resnet_block(x, Lv, blk)
        up = u["up"]
        if up["kind"] == "convT":
            x, Lv = upsample(x, Lv, up)
        else:
            x, Lv = fused_conv(x, Lv, up["w"], up["b"], K=3, pad=1)
    x, Lv = unpatch_rearrange(x, Lv, patch_size)
    return resnet_block(x, Lv, dec["unpatcher"])


def ae1d_forward(x, params):
    Lx = x.shape[-1]
    xs = to_stored(x)
    z, Lz = encode(xs, Lx, params["encoder"], params["patch_size"])
    y, Ly = decode(z, Lz, params["decoder"], params["patch_size"])
    return y[:, :, :Ly], z[:, :, :Lz]


# ----------------------------------- main -------------------------------------

if __name__ == "__main__":
    key = jax.random.PRNGKey(0)
    kx, kp = jax.random.split(key)

    # small config: AE1d(in_channels=2, channels=8, multipliers=[1,2], factors=[2],
    #                    num_blocks=[1], patch_size=2, resnet_groups=4,
    #                    bottleneck=[TanhBottleneck()], bottleneck_channels=4)
    # L=512 keeps the demo small but exercises the multi-L-tile path (4/2/1 tiles).
    B, C_in, L = 2, 2, 512
    x = jax.random.normal(kx, (B, C_in, L), jnp.float32)

    params = init_ae1d_params(
        kp, in_channels=C_in, channels=8, multipliers=[1, 2], factors=[2],
        num_blocks=[1], patch_size=2, resnet_groups=4, bottleneck_channels=4)

    y, z = ae1d_forward(x, params)
    y = jax.block_until_ready(y)
    z = jax.block_until_ready(z)

    assert y.shape == (B, C_in, L), y.shape          # autoencoder output = input shape
    assert z.shape == (B, 4, L // 4), z.shape        # latent: bottleneck_ch, L/(patch*factor)
    assert bool(jnp.all(jnp.isfinite(y))) and bool(jnp.all(jnp.abs(z) <= 1.0))

    print("KERNEL_OK")
</pallas_src>

<mosaic_0001>
module attributes {stable_mosaic.version = 11 : i64} {
  func.func @_gn_stats_kernel(%arg0: i32, %arg1: i32, %arg2: memref<1x2x512xf32, #tpu.memory_space<vmem>>, %arg3: memref<1x2x2xf32, #tpu.memory_space<vmem>>) attributes {dimension_semantics = [#tpu.dimension_semantics<parallel>, #tpu.dimension_semantics<arbitrary>], iteration_bounds = array<i64: 2, 1>, scalar_prefetch = 0 : i64, scratch_operands = 0 : i64, tpu.core_type = #tpu.core_type<tc>, window_params = [{transform_indices = @transform_0, window_bounds = array<i64: 1, 2, 512>}, {transform_indices = @transform_1, window_bounds = array<i64: 1, 2, 2>}]} {
    %c0_i32 = arith.constant 0 : i32
    %0 = arith.cmpi eq, %arg1, %c0_i32 : i32
    %1 = arith.extui %0 : i1 to i32
    %c0_i32_0 = arith.constant 0 : i32
    %2 = arith.cmpi ne, %1, %c0_i32_0 : i32
    scf.if %2 {
      %cst_10 = arith.constant 0.000000e+00 : f32
      %17 = vector.broadcast %cst_10 : f32 to vector<2x2xf32>
      %c0_11 = arith.constant 0 : index
      %c0_12 = arith.constant 0 : index
      %c0_13 = arith.constant 0 : index
      %18 = vector.load %arg3[%c0_11, %c0_12, %c0_13] : memref<1x2x2xf32, #tpu.memory_space<vmem>>, vector<1x2x2xf32>
      %19 = vector.shape_cast %18 : vector<1x2x2xf32> to vector<2x2xf32>
      %20 = vector.shape_cast %17 : vector<2x2xf32> to vector<1x2x2xf32>
      tpu.vector_store %arg3[%c0_11, %c0_12, %c0_13], %20 {strides = array<i32>} : memref<1x2x2xf32, #tpu.memory_space<vmem>>, vector<1x2x2xf32>,
    } else {
    }
    %c0 = arith.constant 0 : index
    %c0_1 = arith.constant 0 : index
    %c0_2 = arith.constant 0 : index
    %3 = vector.load %arg2[%c0, %c0_1, %c0_2] : memref<1x2x512xf32, #tpu.memory_space<vmem>>, vector<1x2x512xf32>
    %4 = vector.shape_cast %3 : vector<1x2x512xf32> to vector<2x512xf32>
    %cst = arith.constant dense<0.000000e+00> : vector<2xf32>
    %5 = vector.multi_reduction <add>, %4, %cst [1] : vector<2x512xf32> to vector<2xf32>
    %6 = vector.shape_cast %5 : vector<2xf32> to vector<2x1xf32>
    %7 = arith.mulf %4, %4 : vector<2x512xf32>
    %cst_3 = arith.constant dense<0.000000e+00> : vector<2xf32>
    %8 = vector.multi_reduction <add>, %7, %cst_3 [1] : vector<2x512xf32> to vector<2xf32>
    %9 = vector.shape_cast %8 : vector<2xf32> to vector<2x1xf32>
    %c0_4 = arith.constant 0 : index
    %c0_5 = arith.constant 0 : index
    %c0_6 = arith.constant 0 : index
    %10 = vector.load %arg3[%c0_4, %c0_5, %c0_6] : memref<1x2x2xf32, #tpu.memory_space<vmem>>, vector<1x2x2xf32>
    %11 = vector.shape_cast %10 : vector<1x2x2xf32> to vector<2x2xf32>
    %12 = tpu.concatenate %6, %9 in 1 : vector<2x1xf32>, vector<2x1xf32> -> vector<2x2xf32>
    %13 = arith.addf %11, %12 : vector<2x2xf32>
    %c0_7 = arith.constant 0 : index
    %c0_8 = arith.constant 0 : index
    %c0_9 = arith.constant 0 : index
    %14 = vector.load %arg3[%c0_7, %c0_8, %c0_9] : memref<1x2x2xf32, #tpu.memory_space<vmem>>, vector<1x2x2xf32>
    %15 = vector.shape_cast %14 : vector<1x2x2xf32> to vector<2x2xf32>
    %16 = vector.shape_cast %13 : vector<2x2xf32> to vector<1x2x2xf32>
    tpu.vector_store %arg3[%c0_7, %c0_8, %c0_9], %16 {strides = array<i32>} : memref<1x2x2xf32, #tpu.memory_space<vmem>>, vector<1x2x2xf32>,
    return
  }
  func.func @transform_0(%arg0: i32, %arg1: i32) -> (i32, i32, i32) {
    %c0_i32 = arith.constant 0 : i32
    %c0_i32_0 = arith.constant 0 : i32
    return %arg0, %c0_i32, %arg1 : i32, i32, i32
  }
  func.func @transform_1(%arg0: i32, %arg1: i32) -> (i32, i32, i32) {
    %c0_i32 = arith.constant 0 : i32
    %c0_i32_0 = arith.constant 0 : i32
    %c0_i32_1 = arith.constant 0 : i32
    return %arg0, %c0_i32, %c0_i32_0 : i32, i32, i32
  }
}

</mosaic_0001>

<llo_original>
// kernel: tpu_custom_call.1
$region0: #{tpu_custom_call.1}
  #allocation0 [shape = 'u32[]', space=smem, size = 0x4, offset = 0x4, fixed_abs, tag = 'smem constant byte address 0x4 - core index']
  #allocation1 [shape = 'u32[144,128]{1,0:T(1,128)}', space=vmem, size = 0x12000, scoped, tag = 'internal scratch']
  %s0 = inlined_call_operand.hbm [shape: f32[2,2,512], index: 0, kind: input, shape index: {}]
  %s1 = inlined_call_operand.hbm [shape: f32[2,2,2], index: 1, kind: output, shape index: {}]
  %s2 = sld [smem:[#allocation0]]
  $region45: #{tpu_custom_call.1} parent=0
    _
  %s4 = ssub.s32 1, %s2
  %s5 = scalar_select 0, %s4, %s2
  $region1: #{tpu_custom_call.1} parent=0
    #allocation2 [shape = 'u8[8192]{0}', space=vmem, size = 0x2000, scoped, tag = 'input window, operand 0']
    #allocation3 [shape = 's32[2]{0}', space=sflag, size = 0x8, scoped, tag = 'scoped memory for tpu_custom_call.1']
    #allocation4 [shape = 's32[2]{0}', space=sflag, size = 0x8, scoped, tag = 'scoped memory for tpu_custom_call.1']
    #allocation5 [shape = 'u8[2048]{0}', space=vmem, size = 0x800, scoped, tag = 'output window, operand 0']
    %6 = vsyncpa [#allocation3], 0
    %s7 = scalar_lea.sflag [#allocation3], 1
    %8 = vsyncpa %s7, 0
    %9 = vsyncpa [#allocation4], 0
    %s10 = scalar_lea.sflag [#allocation4], 1
    %11 = vsyncpa %s10, 0
    loop: start=0, step=1, limit=4
    $region2: #{tpu_custom_call.1} parent=1 // loop_pre_header
      _
    $region3: #{tpu_custom_call.1} parent=1 // loop_header
      %s13 = sphi 0, %s17
      %p14 = scmp.ge.s32.totalorder %s13, 4
      %s20 = sphi 0, %s32
      %s21 = sphi 0, %s28
      %s22 = sphi 0, %s20
      %s23 = sphi 0, %s21
      %s24 = sphi 0, %s22
      %s25 = sphi 0, %s23
      %s37 = sphi 0, %s39
      %s40 = sphi 0, %s37
      %s41 = sphi 0, %s40
      %s57 = sphi 0, %s41
      %s63 = sphi 0, %s65
      %s66 = sphi 0, %s63
      %s67 = sphi 0, %s66
      %s83 = sphi 0, %s67
    $region4: #{tpu_custom_call.1} parent=1 // loop_header_branch
      %16 = sbr.rel (%p14) target = $region8
    $region5: #{tpu_custom_call.1} parent=1 // loop_body
      %s18 = ssub.s32 %s13, 1
      %s19 = ssub.s32 %s13, 2
      %s26 = sadd.s32 1, %s21
      %p27 = scmp.ge.s32.totalorder %s26, 1
      %s28 = scalar_select %p27, 0, %s26
      %s29 = sadd.s32 1, %s20
      %s30 = scalar_select %p27, %s29, %s20
      %p31 = scmp.ge.s32.totalorder %s30, 2
      %s32 = scalar_select %p31, 0, %s30
      %s33 = ssub.s32 %s20, %s32
      %s34 = ssub.s32 %s21, %s28
      %s35 = sor.u32 %s33, %s34
      %p36 = scmp.eq.s32.totalorder %s35, 0
      %s38 = sadd.s32 %s37, 1
      %s39 = scalar_select %p36, %s37, %s38
      %p42 = pneg %p36
      %p43 = scmp.eq.s32.totalorder %s13, 1
      %p44 = por %p42, %p43
      %p45 = scmp.ne.s32.totalorder %s37, %s40
      %p46 = scmp.eq.s32.totalorder %s13, 0
      %p47 = por %p45, %p46
      %p48 = scmp.ne.s32.totalorder %s37, %s40
      %p49 = scmp.eq.s32.totalorder %s18, 1
      %p50 = por %p48, %p49
      %p51 = scmp.ne.s32.totalorder %s40, %s41
      %p52 = scmp.eq.s32.totalorder %s18, 0
      %p53 = por %p51, %p52
      %p54 = scmp.ne.s32.totalorder %s40, %s41
      %p55 = scmp.eq.s32.totalorder %s19, 1
      %p56 = por %p54, %p55
      %p58 = scmp.ne.s32.totalorder %s41, %s57
      %p59 = scmp.eq.s32.totalorder %s19, 0
      %p60 = por %p58, %p59
      %s61 = ssub.s32 %s20, %s32
      %p62 = scmp.eq.s32.totalorder %s61, 0
      %s64 = sadd.s32 %s63, 1
      %s65 = scalar_select %p62, %s63, %s64
      %p68 = pneg %p62
      %p69 = scmp.eq.s32.totalorder %s13, 1
      %p70 = por %p68, %p69
      %p71 = scmp.ne.s32.totalorder %s63, %s66
      %p72 = scmp.eq.s32.totalorder %s13, 0
      %p73 = por %p71, %p72
      %p74 = scmp.ne.s32.totalorder %s63, %s66
      %p75 = scmp.eq.s32.totalorder %s18, 1
      %p76 = por %p74, %p75
      %p77 = scmp.ne.s32.totalorder %s66, %s67
      %p78 = scmp.eq.s32.totalorder %s18, 0
      %p79 = por %p77, %p78
      %p80 = scmp.ne.s32.totalorder %s66, %s67
      %p81 = scmp.eq.s32.totalorder %s19, 1
      %p82 = por %p80, %p81
      %p84 = scmp.ne.s32.totalorder %s67, %s83
      %p85 = scmp.eq.s32.totalorder %s19, 0
      %p86 = por %p84, %p85
      %p87 = scmp.le.s32.totalorder 1, %s13
      %p88 = scmp.lt.s32.totalorder %s13, 3
      %p89 = pnand %p87, %p88
      %p90 = pneg %p89
      // Predicated region
      $region9: #{tpu_custom_call.1} parent=5 // pred_check
        _
      $region10: #{tpu_custom_call.1} parent=5 // pred_check_branch
        %92 = sbr.rel (%p89) target = $region12
      $region11: #{tpu_custom_call.1} parent=5 // pred_region
        %s93 = ssub.s32 %s13, 1
      $region12: #{tpu_custom_call.1} parent=5 // pred_fallthru
        _
      %p94 = scmp.lt.s32.totalorder %s13, 2
      // Predicated region
      $region13: #{tpu_custom_call.1} parent=5 // pred_check
        %p95 = pneg %p94
      $region14: #{tpu_custom_call.1} parent=5 // pred_check_branch
        %97 = sbr.rel (%p95) target = $region16
      $region15: #{tpu_custom_call.1} parent=5 // pred_region
        // Predicated region
        $region17: #{tpu_custom_call.1} parent=15 // pred_check
          %p98 = pneg %p47
        $region18: #{tpu_custom_call.1} parent=15 // pred_check_branch
          %100 = sbr.rel (%p98) target = $region20
        $region19: #{tpu_custom_call.1} parent=15 // pred_region
          %s101 = sand.u32 %s37, 1
          %s102 = scalar_lea.sflag [#allocation3], %s101
          %s103 = sand.u32 %s37, 1
          %s104 = smul.addr %s103, 8
          %s105 = scalar_lea.vmem [#allocation2], %s104
          %s106 = smul.u32 4, %s21
          %s108 = ssub.s32 128, 128
          %109 = vsyncadd %s102, %s108
          %s110 = smul.addr %s20, 4
          %s111 = sadd.s32 %s106, %s110
          %s112 = smul.addr %s111, 32
          %s113 = scalar_lea.hbm %s0, %s112
          %s115 = sshll.u32 %s105, 4
          %s116 = int_to_ptr.vmem [resolvable:$true] %s115
          %118 = dma.hbm_to_vmem [thread:$0]  %s113, 128, %s116, %s102
        $region20: #{tpu_custom_call.1} parent=15 // pred_fallthru
          _
      $region16: #{tpu_custom_call.1} parent=5 // pred_fallthru
        _
      %p119 = scmp.le.s32.totalorder 1, %s13
      %p120 = scmp.lt.s32.totalorder %s13, 3
      %p121 = pnand %p119, %p120
      %p122 = pneg %p121
      // Predicated region
      $region21: #{tpu_custom_call.1} parent=5 // pred_check
        _
      $region22: #{tpu_custom_call.1} parent=5 // pred_check_branch
        %124 = sbr.rel (%p121) target = $region24
      $region23: #{tpu_custom_call.1} parent=5 // pred_region
        %s125 = ssub.s32 %s13, 1
        %s126 = sand.u32 %s40, 1
        %s127 = scalar_lea.sflag [#allocation3], %s126
        %s128 = sand.u32 %s40, 1
        %s129 = smul.addr %s128, 8
        %s130 = scalar_lea.vmem [#allocation2], %s129
        // Predicated region
        $region25: #{tpu_custom_call.1} parent=23 // pred_check
          %p131 = pneg %p53
        $region26: #{tpu_custom_call.1} parent=23 // pred_check_branch
          %133 = sbr.rel (%p131) target = $region28
        $region27: #{tpu_custom_call.1} parent=23 // pred_region
          %134 = dma.done %s127, 128
        $region28: #{tpu_custom_call.1} parent=23 // pred_fallthru
          _
        %s135 = sand.u32 %s40, 1
        %s136 = scalar_lea.sflag [#allocation3], %s135
        %s137 = sand.u32 %s40, 1
        %s138 = smul.addr %s137, 8
        %s139 = scalar_lea.vmem [#allocation2], %s138
        %p140 = pneg %p53
        %p141 = pneg %p50
        %p142 = pneg %p79
        %p143 = pneg %p76
        %s144 = sand.u32 %s66, 1
        %s145 = scalar_lea.sflag [#allocation4], %s144
        %s146 = sand.u32 %s66, 1
        %s147 = smul.addr %s146, 2
        %s148 = scalar_lea.vmem [#allocation5], %s147
        %s149 = smul.u32 4, %s23
        %p150 = scmp.eq.s32.totalorder %s23, 0
        // Predicated region
        $region29: #{tpu_custom_call.1} parent=23 // pred_check
          %p151 = pneg %p150
        $region30: #{tpu_custom_call.1} parent=23 // pred_check_branch
          %153 = sbr.rel (%p151) target = $region32
        $region31: #{tpu_custom_call.1} parent=23 // pred_region
          %vm154 = vcmask 9216
          %155 = vst.msk [vmem:[%s148] sm:$0x3] %vm154, 0.0
        $region32: #{tpu_custom_call.1} parent=23 // pred_fallthru
          _
        %v156 = vld [vmem:[%s130] sm:$0xff]
        %v158 = vcombine.high %v156, %v156
        %v160 = vunpack.c.l.s4 1983009808
        %v161 = vunpack.c.0.s8 %v160
        %v162 = vlaneseq
        %v163 = vshrl.u32 %v162, 7
        %v164 = vsub.s32 %v161, %v163
        %v165 = vrot.slane %v156, %v164
        %v167 = vunpack.c.l.s4 1983009808
        %v168 = vunpack.c.0.s8 %v167
        %v169 = vlaneseq
        %v170 = vshrl.u32 %v169, 7
        %v171 = vsub.s32 %v168, %v170
        %v172 = vrot.slane %v158, %v171
        %v173 = vcombine.high %v165, %v165
        %v174 = vcombine.high %v172, %v172
        %vm179 = vcmask 1041408
        %v180 = vsel %vm179, %v165, 0.0
        %v181 = vsel %vm179, %v173, 0.0
        %v182 = vadd.f32 %v180, %v181
        %v183 = vsel %vm179, %v172, 0.0
        %v184 = vadd.f32 %v182, %v183
        %v185 = vsel %vm179, %v174, 0.0
        %v186 = vadd.f32 %v184, %v185
        %187 = vadd.xlane.f32.xlu0 %v186
        %v188 = vpop.xlane.xlu0 %187
        %v189 = vmul.f32 %v156, %v156
        %v191 = vcombine.high %v189, %v189
        %v193 = vunpack.c.l.s4 1983009808
        %v194 = vunpack.c.0.s8 %v193
        %v195 = vlaneseq
        %v196 = vshrl.u32 %v195, 7
        %v197 = vsub.s32 %v194, %v196
        %v198 = vrot.slane %v189, %v197
        %v200 = vunpack.c.l.s4 1983009808
        %v201 = vunpack.c.0.s8 %v200
        %v202 = vlaneseq
        %v203 = vshrl.u32 %v202, 7
        %v204 = vsub.s32 %v201, %v203
        %v205 = vrot.slane %v191, %v204
        %v206 = vcombine.high %v198, %v198
        %v207 = vcombine.high %v205, %v205
        %v212 = vsel %vm179, %v198, 0.0
        %v213 = vsel %vm179, %v206, 0.0
        %v214 = vadd.f32 %v212, %v213
        %v215 = vsel %vm179, %v205, 0.0
        %v216 = vadd.f32 %v214, %v215
        %v217 = vsel %vm179, %v207, 0.0
        %v218 = vadd.f32 %v216, %v217
        %219 = vadd.xlane.f32.xlu0 %v218
        %v220 = vpop.xlane.xlu0 %219
        %v221 = vld [vmem:[%s148] sm:$0x3]
        %vm222 = vcmask 7168
        %v223 = vsel %vm222, %v188, %v220
        %v224 = vadd.f32 %v221, %v223
        %vm225 = vcmask 9216
        %226 = vst.msk [vmem:[%s148] sm:$0x3] %vm225, %v224
        %s227 = sand.u32 %s66, 1
        %s228 = scalar_lea.sflag [#allocation4], %s227
        %s229 = sand.u32 %s66, 1
        %s230 = smul.addr %s229, 2
        %s231 = scalar_lea.vmem [#allocation5], %s230
        // Predicated region
        $region33: #{tpu_custom_call.1} parent=23 // pred_check
          %p232 = pneg %p76
        $region34: #{tpu_custom_call.1} parent=23 // pred_check_branch
          %234 = sbr.rel (%p232) target = $region36
        $region35: #{tpu_custom_call.1} parent=23 // pred_region
          %s236 = ssub.s32 32, 32
          %237 = vsyncadd %s228, %s236
          %s238 = smul.addr %s22, 32
          %s239 = scalar_lea.hbm %s1, %s238
          %s241 = sshll.u32 %s231, 4
          %s242 = int_to_ptr.vmem [resolvable:$true] %s241
          %244 = dma.vmem_to_hbm [thread:$0]  %s242, 32, %s239, %s228
        $region36: #{tpu_custom_call.1} parent=23 // pred_fallthru
          _
      $region24: #{tpu_custom_call.1} parent=5 // pred_fallthru
        _
      %p245 = scmp.le.s32.totalorder 2, %s13
      // Predicated region
      $region37: #{tpu_custom_call.1} parent=5 // pred_check
        %p246 = pneg %p245
      $region38: #{tpu_custom_call.1} parent=5 // pred_check_branch
        %248 = sbr.rel (%p246) target = $region40
      $region39: #{tpu_custom_call.1} parent=5 // pred_region
        %s249 = ssub.s32 %s13, 2
        // Predicated region
        $region41: #{tpu_custom_call.1} parent=39 // pred_check
          %p250 = pneg %p82
        $region42: #{tpu_custom_call.1} parent=39 // pred_check_branch
          %252 = sbr.rel (%p250) target = $region44
        $region43: #{tpu_custom_call.1} parent=39 // pred_region
          %s253 = sand.u32 %s67, 1
          %s254 = scalar_lea.sflag [#allocation4], %s253
          %s255 = sand.u32 %s67, 1
          %s256 = smul.addr %s255, 2
          %s257 = scalar_lea.vmem [#allocation5], %s256
          %258 = dma.done %s254, 32
        $region44: #{tpu_custom_call.1} parent=39 // pred_fallthru
          _
      $region40: #{tpu_custom_call.1} parent=5 // pred_fallthru
        _
    $region6: #{tpu_custom_call.1} parent=1 // loop_footer
      %s17 = sadd.s32 1, %s13
    $region7: #{tpu_custom_call.1} parent=1 // loop_footer_branch
      %12 = sbr.rel target = $region3
    $region8: #{tpu_custom_call.1} parent=1 // loop_exit
      _
    %259 = vsyncpa [#allocation3], 1
    %s260 = scalar_lea.sflag [#allocation3], 1
    %261 = vsyncpa %s260, 1
    %262 = vsyncpa [#allocation4], 1
    %s263 = scalar_lea.sflag [#allocation4], 1
    %264 = vsyncpa %s263, 1

</llo_original>
